<compile_context>
chip_gen: v5e
topology: v5e:2x2
jax: 0.10.0
libtpu: 0.0.40
codegen_flags: <defaults>
</compile_context>

<pallas_src>
import jax
import jax.numpy as jnp
from jax.experimental import pallas as pl
from jax.experimental.pallas import tpu as pltpu


TILE_N = 128   # row/reduction tile of A_hat (multiple of 128 -> MXU/lane aligned)


# ----------------------------------------------------------------------------
# Pallas kernel:  acc += A[i,k] @ (X[k] @ W1);  at last k:
#                 h1 = relu(acc + b1);  out[i] = (pool@A)[:, i] @ h1
# ----------------------------------------------------------------------------
def molecule_gnn_kernel(a_ref, x_ref, w1_ref, b1_ref, pa_ref, o_ref, acc_ref):
    k = pl.program_id(1)

    @pl.when(k == 0)
    def _():
        acc_ref[...] = jnp.zeros_like(acc_ref)

    # Layer-1 feature transform for this source-node tile (bf16 in, f32 out).
    xw1 = jnp.dot(x_ref[...], w1_ref[...],
                  preferred_element_type=jnp.float32)            # (TK, Hp) f32

    # Accumulate the normalized-adjacency matmul in f32.
    acc_ref[...] += jnp.dot(a_ref[...], xw1.astype(jnp.bfloat16),
                            preferred_element_type=jnp.float32)  # (TM, Hp)

    @pl.when(k == pl.num_programs(1) - 1)
    def _():
        h1 = jnp.maximum(acc_ref[...] + b1_ref[...], 0.0)        # (TM, Hp) f32
        # Fused conv2 + mean-pool + fc tail: only (pool @ A_hat) @ h1 remains
        # inside the kernel (lane-dense (Gp, Hp) output slab per row tile).
        o_ref[0] = jnp.dot(pa_ref[...], h1.astype(jnp.bfloat16),
                           preferred_element_type=jnp.float32)   # (Gp, Hp)


# ----------------------------------------------------------------------------
# Wrapper: algebraic fusion, padding, bf16 casts, tiled pallas_call, tiny tail
# ----------------------------------------------------------------------------
def molecule_gnn_forward(a_hat, x, w1, b1, w2, b2, pool, w_fc, b_fc):
    N, F = x.shape
    H = w1.shape[1]
    G = pool.shape[0]

    # ---- fold the linear tail (conv2 + mean pool + fc) into constants -------
    #   out = P @ (A @ (h1 @ W2) + b2) @ Wfc + bfc
    #       = (P @ A) @ h1 @ (W2 @ Wfc) + b2 @ Wfc + bfc        (P rows sum to 1)
    pa = pool @ a_hat                      # (G, N)
    w2fc = w2 @ w_fc                       # (H, 1)
    tail_bias = b2 @ w_fc + b_fc           # (1, 1)

    # ---- pad to TPU-friendly shapes ------------------------------------------
    def rup(v, m):
        return ((v + m - 1) // m) * m

    Np = rup(N, TILE_N)
    Hp = rup(max(H, 128), 128)             # lane-dense hidden width
    Gp = rup(max(G, 8), 8)                 # sublane-aligned graph count

    a_p = jnp.zeros((Np, Np), jnp.float32).at[:N, :N].set(a_hat)
    x_p = jnp.zeros((Np, F), jnp.float32).at[:N, :].set(x)
    w1_p = jnp.zeros((F, Hp), jnp.float32).at[:, :H].set(w1)
    b1_p = jnp.zeros((1, Hp), jnp.float32).at[:, :H].set(b1)
    pa_p = jnp.zeros((Gp, Np), jnp.float32).at[:G, :N].set(pa)

    # bf16 for the heavy MXU operands; f32 accumulation inside the kernel.
    a_bf = a_p.astype(jnp.bfloat16)
    x_bf = x_p.astype(jnp.bfloat16)
    w1_bf = w1_p.astype(jnp.bfloat16)
    pa_bf = pa_p.astype(jnp.bfloat16)

    ni = Np // TILE_N                      # row tiles  (parallel -> megacore)
    nk = Np // TILE_N                      # reduction tiles (arbitrary, last)

    flops = (2 * ni * Np * F * Hp          # X @ W1 (recomputed per row tile)
             + 2 * Np * Np * Hp            # A_hat @ XW1
             + 2 * Gp * Np * Hp)           # PA @ h1
    bytes_accessed = (a_bf.size * 2 + ni * x_bf.size * 2 + ni * nk * w1_bf.size * 2
                      + pa_bf.size * 2 + b1_p.size * 4 + ni * Gp * Hp * 4)

    partials = pl.pallas_call(
        molecule_gnn_kernel,
        out_shape=jax.ShapeDtypeStruct((ni, Gp, Hp), jnp.float32),
        grid_spec=pltpu.PrefetchScalarGridSpec(
            num_scalar_prefetch=0,
            grid=(ni, nk),
            in_specs=[
                pl.BlockSpec((TILE_N, TILE_N), lambda i, k: (i, k)),   # A_hat tile
                pl.BlockSpec((TILE_N, F), lambda i, k: (k, 0)),        # X source tile
                pl.BlockSpec((F, Hp), lambda i, k: (0, 0)),            # W1
                pl.BlockSpec((1, Hp), lambda i, k: (0, 0)),            # b1
                pl.BlockSpec((Gp, TILE_N), lambda i, k: (0, i)),       # (pool@A) col tile
            ],
            out_specs=pl.BlockSpec((1, Gp, Hp), lambda i, k: (i, 0, 0)),
            scratch_shapes=[pltpu.VMEM((TILE_N, Hp), jnp.float32)],    # f32 accumulator
        ),
        compiler_params=pltpu.CompilerParams(
            dimension_semantics=("parallel", "arbitrary"),
            vmem_limit_bytes=32 * 1024 * 1024,
        ),
        cost_estimate=pl.CostEstimate(flops=flops, transcendentals=0,
                                      bytes_accessed=bytes_accessed),
    )(a_bf, x_bf, w1_bf, b1_p, pa_bf)

    # Tiny epilogue in the wrapper: sum row-tile contributions, H -> 1 dot.
    pooled = partials.sum(axis=0)[:G, :H]          # (G, H)
    return pooled @ w2fc + tail_bias               # (G, 1)


# ----------------------------------------------------------------------------
# Glue: dense normalized adjacency and mean-pool matrix (plain JAX)
# ----------------------------------------------------------------------------
def build_gcn_adjacency(edge_index, num_nodes):
    """A_hat[i, j] = deg^{-1/2}[i] * deg^{-1/2}[j] for edge j->i plus one self
    loop per node (existing self loops in edge_index are ignored, matching
    PyG's add_remaining_self_loops on unweighted graphs)."""
    row, col = edge_index[0], edge_index[1]
    not_loop = (row != col).astype(jnp.float32)
    loops = jnp.arange(num_nodes, dtype=edge_index.dtype)
    src = jnp.concatenate([row, loops])
    dst = jnp.concatenate([col, loops])
    w = jnp.concatenate([not_loop, jnp.ones((num_nodes,), jnp.float32)])
    deg = jnp.zeros((num_nodes,), jnp.float32).at[dst].add(w)
    dis = jnp.where(deg > 0, jax.lax.rsqrt(deg), 0.0)
    norm = w * dis[src] * dis[dst]
    return jnp.zeros((num_nodes, num_nodes), jnp.float32).at[dst, src].add(norm)


def build_mean_pool(batch, num_graphs, num_nodes):
    """P[g, n] = 1/count_g if batch[n] == g else 0."""
    onehot = (batch[None, :] == jnp.arange(num_graphs)[:, None]).astype(jnp.float32)
    counts = jnp.maximum(onehot.sum(axis=1, keepdims=True), 1.0)
    return onehot / counts


def init_params(key, num_node_features, hidden_channels):
    k1, k2, k3 = jax.random.split(key, 3)

    def glorot(k, fan_in, fan_out):
        s = jnp.sqrt(6.0 / (fan_in + fan_out))
        return jax.random.uniform(k, (fan_in, fan_out), jnp.float32, -s, s)

    w1 = glorot(k1, num_node_features, hidden_channels)
    b1 = jnp.zeros((1, hidden_channels), jnp.float32)
    w2 = glorot(k2, hidden_channels, hidden_channels)
    b2 = jnp.zeros((1, hidden_channels), jnp.float32)
    w_fc = glorot(k3, hidden_channels, 1)
    b_fc = jnp.zeros((1, 1), jnp.float32)
    return w1, b1, w2, b2, w_fc, b_fc


if __name__ == "__main__":
    # Synthetic molecule batch: 8 graphs x 32 nodes = 256 nodes, 16 features.
    G_graphs, nodes_per_graph = 8, 32
    N = G_graphs * nodes_per_graph
    F, H = 16, 64

    key = jax.random.PRNGKey(0)
    kx, kp = jax.random.split(key)
    x = jax.random.normal(kx, (N, F), jnp.float32)

    # Each graph is an undirected ring (both edge directions listed).
    src, dst = [], []
    for g in range(G_graphs):
        base = g * nodes_per_graph
        for i in range(nodes_per_graph):
            u, v = base + i, base + (i + 1) % nodes_per_graph
            src += [u, v]
            dst += [v, u]
    edge_index = jnp.array([src, dst], dtype=jnp.int32)            # (2, E)
    batch = jnp.repeat(jnp.arange(G_graphs, dtype=jnp.int32), nodes_per_graph)

    a_hat = build_gcn_adjacency(edge_index, N)                      # (N, N)
    pool = build_mean_pool(batch, G_graphs, N)                      # (G, N)
    w1, b1, w2, b2, w_fc, b_fc = init_params(kp, F, H)

    fwd = jax.jit(molecule_gnn_forward)
    out = jax.block_until_ready(fwd(a_hat, x, w1, b1, w2, b2, pool, w_fc, b_fc))

    # Reference (unfused, f32) -- same math as the torch module.
    h1 = jnp.maximum(a_hat @ (x @ w1) + b1, 0.0)
    h2 = a_hat @ (h1 @ w2) + b2
    ref = (pool @ h2) @ w_fc + b_fc

    assert out.shape == (G_graphs, 1)
    assert jnp.allclose(out, ref, atol=5e-2, rtol=5e-2), \
        float(jnp.max(jnp.abs(out - ref)))

    print("KERNEL_OK")
</pallas_src>

<mosaic_0001>
module attributes {stable_mosaic.version = 11 : i64} {
  func.func @molecule_gnn_kernel(%arg0: i32, %arg1: i32, %arg2: memref<128x128xbf16, #tpu.memory_space<vmem>>, %arg3: memref<128x16xbf16, #tpu.memory_space<vmem>>, %arg4: memref<16x128xbf16, #tpu.memory_space<vmem>>, %arg5: memref<1x128xf32, #tpu.memory_space<vmem>>, %arg6: memref<8x128xbf16, #tpu.memory_space<vmem>>, %arg7: memref<1x8x128xf32, #tpu.memory_space<vmem>>, %arg8: memref<128x128xf32, #tpu.memory_space<vmem>>) attributes {dimension_semantics = [#tpu.dimension_semantics<parallel>, #tpu.dimension_semantics<arbitrary>], iteration_bounds = array<i64: 2, 2>, scalar_prefetch = 0 : i64, scratch_operands = 1 : i64, tpu.core_type = #tpu.core_type<tc>, window_params = [{transform_indices = @transform_0, window_bounds = array<i64: 128, 128>}, {transform_indices = @transform_1, window_bounds = array<i64: 128, 16>}, {pipeline_mode = #tpu.pipeline_mode<synchronous>, transform_indices = @transform_2, window_bounds = array<i64: 16, 128>}, {pipeline_mode = #tpu.pipeline_mode<synchronous>, transform_indices = @transform_3, window_bounds = array<i64: 1, 128>}, {transform_indices = @transform_4, window_bounds = array<i64: 8, 128>}, {transform_indices = @transform_5, window_bounds = array<i64: 1, 8, 128>}]} {
    %c0_i32 = arith.constant 0 : i32
    %0 = arith.cmpi eq, %arg1, %c0_i32 : i32
    %1 = arith.extui %0 : i1 to i32
    %c0_i32_0 = arith.constant 0 : i32
    %2 = arith.cmpi ne, %1, %c0_i32_0 : i32
    scf.if %2 {
      %cst_12 = arith.constant 0.000000e+00 : f32
      %15 = vector.broadcast %cst_12 : f32 to vector<128x128xf32>
      %c0_13 = arith.constant 0 : index
      %c0_14 = arith.constant 0 : index
      %16 = vector.load %arg8[%c0_13, %c0_14] : memref<128x128xf32, #tpu.memory_space<vmem>>, vector<128x128xf32>
      tpu.vector_store %arg8[%c0_13, %c0_14], %15 {strides = array<i32>} : memref<128x128xf32, #tpu.memory_space<vmem>>, vector<128x128xf32>,
    } else {
    }
    %c0 = arith.constant 0 : index
    %c0_1 = arith.constant 0 : index
    %3 = vector.load %arg3[%c0, %c0_1] : memref<128x16xbf16, #tpu.memory_space<vmem>>, vector<128x16xbf16>
    %c0_2 = arith.constant 0 : index
    %c0_3 = arith.constant 0 : index
    %4 = vector.load %arg4[%c0_2, %c0_3] : memref<16x128xbf16, #tpu.memory_space<vmem>>, vector<16x128xbf16>
    %cst = arith.constant dense<0.000000e+00> : vector<128x128xf32>
    %5 = tpu.matmul %3, %4, %cst {dimension_numbers = #tpu.dot_dimension_numbers<[1], [0], [0], [1], [0, 0, 1, 1], [], []>} : vector<128x16xbf16>, vector<16x128xbf16>, vector<128x128xf32> -> vector<128x128xf32>
    %c0_4 = arith.constant 0 : index
    %c0_5 = arith.constant 0 : index
    %6 = vector.load %arg8[%c0_4, %c0_5] : memref<128x128xf32, #tpu.memory_space<vmem>>, vector<128x128xf32>
    %c0_6 = arith.constant 0 : index
    %c0_7 = arith.constant 0 : index
    %7 = vector.load %arg2[%c0_6, %c0_7] : memref<128x128xbf16, #tpu.memory_space<vmem>>, vector<128x128xbf16>
    %8 = arith.truncf %5 : vector<128x128xf32> to vector<128x128xbf16>
    %cst_8 = arith.constant dense<0.000000e+00> : vector<128x128xf32>
    %9 = tpu.matmul %7, %8, %cst_8 {dimension_numbers = #tpu.dot_dimension_numbers<[1], [0], [0], [1], [0, 0, 1, 1], [], []>} : vector<128x128xbf16>, vector<128x128xbf16>, vector<128x128xf32> -> vector<128x128xf32>
    %10 = arith.addf %6, %9 : vector<128x128xf32>
    %c0_9 = arith.constant 0 : index
    %c0_10 = arith.constant 0 : index
    %11 = vector.load %arg8[%c0_9, %c0_10] : memref<128x128xf32, #tpu.memory_space<vmem>>, vector<128x128xf32>
    tpu.vector_store %arg8[%c0_9, %c0_10], %10 {strides = array<i32>} : memref<128x128xf32, #tpu.memory_space<vmem>>, vector<128x128xf32>,
    %c1_i32 = arith.constant 1 : i32
    %12 = arith.cmpi eq, %arg1, %c1_i32 : i32
    %13 = arith.extui %12 : i1 to i32
    %c0_i32_11 = arith.constant 0 : i32
    %14 = arith.cmpi ne, %13, %c0_i32_11 : i32
    scf.if %14 {
      %c0_12 = arith.constant 0 : index
      %c0_13 = arith.constant 0 : index
      %15 = vector.load %arg8[%c0_12, %c0_13] : memref<128x128xf32, #tpu.memory_space<vmem>>, vector<128x128xf32>
      %c0_14 = arith.constant 0 : index
      %c0_15 = arith.constant 0 : index
      %16 = vector.load %arg5[%c0_14, %c0_15] : memref<1x128xf32, #tpu.memory_space<vmem>>, vector<1x128xf32>
      %17 = vector.broadcast %16 : vector<1x128xf32> to vector<128x128xf32>
      %18 = arith.addf %15, %17 : vector<128x128xf32>
      %cst_16 = arith.constant 0.000000e+00 : f32
      %19 = vector.broadcast %cst_16 : f32 to vector<128x128xf32>
      %20 = arith.maximumf %18, %19 : vector<128x128xf32>
      %c0_17 = arith.constant 0 : index
      %c0_18 = arith.constant 0 : index
      %21 = vector.load %arg6[%c0_17, %c0_18] : memref<8x128xbf16, #tpu.memory_space<vmem>>, vector<8x128xbf16>
      %22 = arith.truncf %20 : vector<128x128xf32> to vector<128x128xbf16>
      %cst_19 = arith.constant dense<0.000000e+00> : vector<8x128xf32>
      %23 = tpu.matmul %21, %22, %cst_19 {dimension_numbers = #tpu.dot_dimension_numbers<[1], [0], [0], [1], [0, 0, 1, 1], [], []>} : vector<8x128xbf16>, vector<128x128xbf16>, vector<8x128xf32> -> vector<8x128xf32>
      %c0_20 = arith.constant 0 : index
      %c0_21 = arith.constant 0 : index
      %c0_22 = arith.constant 0 : index
      %24 = vector.load %arg7[%c0_20, %c0_21, %c0_22] : memref<1x8x128xf32, #tpu.memory_space<vmem>>, vector<1x8x128xf32>
      %25 = vector.shape_cast %24 : vector<1x8x128xf32> to vector<8x128xf32>
      %26 = vector.shape_cast %23 : vector<8x128xf32> to vector<1x8x128xf32>
      tpu.vector_store %arg7[%c0_20, %c0_21, %c0_22], %26 {strides = array<i32>} : memref<1x8x128xf32, #tpu.memory_space<vmem>>, vector<1x8x128xf32>,
    } else {
    }
    return
  }
  func.func @transform_0(%arg0: i32, %arg1: i32) -> (i32, i32) {
    %c0_i32 = arith.constant 0 : i32
    return %arg0, %arg1 : i32, i32
  }
  func.func @transform_1(%arg0: i32, %arg1: i32) -> (i32, i32) {
    %c0_i32 = arith.constant 0 : i32
    %c0_i32_0 = arith.constant 0 : i32
    return %arg1, %c0_i32 : i32, i32
  }
  func.func @transform_2(%arg0: i32, %arg1: i32) -> (i32, i32) {
    %c0_i32 = arith.constant 0 : i32
    %c0_i32_0 = arith.constant 0 : i32
    %c0_i32_1 = arith.constant 0 : i32
    return %c0_i32, %c0_i32_0 : i32, i32
  }
  func.func @transform_3(%arg0: i32, %arg1: i32) -> (i32, i32) {
    %c0_i32 = arith.constant 0 : i32
    %c0_i32_0 = arith.constant 0 : i32
    %c0_i32_1 = arith.constant 0 : i32
    return %c0_i32, %c0_i32_0 : i32, i32
  }
  func.func @transform_4(%arg0: i32, %arg1: i32) -> (i32, i32) {
    %c0_i32 = arith.constant 0 : i32
    %c0_i32_0 = arith.constant 0 : i32
    return %c0_i32, %arg0 : i32, i32
  }
  func.func @transform_5(%arg0: i32, %arg1: i32) -> (i32, i32, i32) {
    %c0_i32 = arith.constant 0 : i32
    %c0_i32_0 = arith.constant 0 : i32
    %c0_i32_1 = arith.constant 0 : i32
    return %arg0, %c0_i32, %c0_i32_0 : i32, i32, i32
  }
}

</mosaic_0001>

<llo_original>
// kernel: molecule_gnn_forward.1
$region0: #{molecule_gnn_forward.1}
  #allocation0 [shape = 'u32[]', space=smem, size = 0x4, offset = 0x4, fixed_abs, tag = 'smem constant byte address 0x4 - core index']
  #allocation1 [shape = 'u32[72,128]{1,0:T(1,128)}', space=vmem, size = 0x9000, scoped, tag = 'internal scratch']
  #allocation2 [shape = 'f32[128,128]{1,0:T(8,128)}', space=vmem, size = 0x10000, scoped, tag = 'scratch operand']
  %s0 = inlined_call_operand.vmem [shape: bf16[256,256], index: 0, kind: input, shape index: {}]
  %s1 = inlined_call_operand.vmem [shape: bf16[256,16], index: 1, kind: input, shape index: {}]
  %s2 = inlined_call_operand.vmem [shape: bf16[16,128], index: 2, kind: input, shape index: {}]
  %s3 = inlined_call_operand.vmem [shape: f32[1,128], index: 3, kind: input, shape index: {}]
  %s4 = inlined_call_operand.vmem [shape: bf16[8,256], index: 4, kind: input, shape index: {}]
  %s5 = inlined_call_operand.vmem [shape: f32[2,8,128], index: 5, kind: output, shape index: {}]
  %s6 = sld [smem:[#allocation0]]
  $region102: #{molecule_gnn_forward.1} parent=0
    _
  %s8 = ssub.s32 1, %s6
  %s9 = scalar_select 0, %s8, %s6
  $region1: #{molecule_gnn_forward.1} parent=0
    #allocation3 [shape = 'u8[65536]{0}', space=vmem, size = 0x10000, scoped, tag = 'input window, operand 0']
    loop: start=0, step=1, limit=6
    $region2: #{molecule_gnn_forward.1} parent=1 // loop_pre_header
      _
    $region3: #{molecule_gnn_forward.1} parent=1 // loop_header
      %s11 = sphi 0, %s15
      %p12 = scmp.ge.s32.totalorder %s11, 6
      %s18 = sphi 0, %s30
      %s19 = sphi 0, %s26
      %s20 = sphi 0, %s18
      %s21 = sphi 0, %s19
      %s22 = sphi 0, %s20
      %s23 = sphi 0, %s21
      %s35 = sphi 0, %s37
      %s38 = sphi 0, %s35
      %s39 = sphi 0, %s38
      %s55 = sphi 0, %s39
      %s61 = sphi 0, %s63
      %s64 = sphi 0, %s61
      %s65 = sphi 0, %s64
      %s81 = sphi 0, %s65
      %s85 = sphi 0, %s85
      %s87 = sphi 0, %s85
      %s88 = sphi 0, %s87
      %s102 = sphi 0, %s88
      %s106 = sphi 0, %s106
      %s108 = sphi 0, %s106
      %s109 = sphi 0, %s108
      %s123 = sphi 0, %s109
      %s129 = sphi 0, %s131
      %s132 = sphi 0, %s129
      %s133 = sphi 0, %s132
      %s149 = sphi 0, %s133
      %s155 = sphi 0, %s157
      %s158 = sphi 0, %s155
      %s159 = sphi 0, %s158
      %s175 = sphi 0, %s159
    $region4: #{molecule_gnn_forward.1} parent=1 // loop_header_branch
      %14 = sbr.rel (%p12) target = $region8
    $region5: #{molecule_gnn_forward.1} parent=1 // loop_body
      %s16 = ssub.s32 %s11, 1
      %s17 = ssub.s32 %s11, 2
      %s24 = sadd.s32 1, %s19
      %p25 = scmp.ge.s32.totalorder %s24, 2
      %s26 = scalar_select %p25, 0, %s24
      %s27 = sadd.s32 1, %s18
      %s28 = scalar_select %p25, %s27, %s18
      %p29 = scmp.ge.s32.totalorder %s28, 2
      %s30 = scalar_select %p29, 0, %s28
      %s31 = ssub.s32 %s18, %s30
      %s32 = ssub.s32 %s19, %s26
      %s33 = sor.u32 %s31, %s32
      %p34 = scmp.eq.s32.totalorder %s33, 0
      %s36 = sadd.s32 %s35, 1
      %s37 = scalar_select %p34, %s35, %s36
      %p40 = pneg %p34
      %p41 = scmp.eq.s32.totalorder %s11, 3
      %p42 = por %p40, %p41
      %p43 = scmp.ne.s32.totalorder %s35, %s38
      %p44 = scmp.eq.s32.totalorder %s11, 0
      %p45 = por %p43, %p44
      %p46 = scmp.ne.s32.totalorder %s35, %s38
      %p47 = scmp.eq.s32.totalorder %s16, 3
      %p48 = por %p46, %p47
      %p49 = scmp.ne.s32.totalorder %s38, %s39
      %p50 = scmp.eq.s32.totalorder %s16, 0
      %p51 = por %p49, %p50
      %p52 = scmp.ne.s32.totalorder %s38, %s39
      %p53 = scmp.eq.s32.totalorder %s17, 3
      %p54 = por %p52, %p53
      %p56 = scmp.ne.s32.totalorder %s39, %s55
      %p57 = scmp.eq.s32.totalorder %s17, 0
      %p58 = por %p56, %p57
      %s59 = ssub.s32 %s19, %s26
      %p60 = scmp.eq.s32.totalorder %s59, 0
      %s62 = sadd.s32 %s61, 1
      %s63 = scalar_select %p60, %s61, %s62
      %p66 = pneg %p60
      %p67 = scmp.eq.s32.totalorder %s11, 3
      %p68 = por %p66, %p67
      %p69 = scmp.ne.s32.totalorder %s61, %s64
      %p70 = scmp.eq.s32.totalorder %s11, 0
      %p71 = por %p69, %p70
      %p72 = scmp.ne.s32.totalorder %s61, %s64
      %p73 = scmp.eq.s32.totalorder %s16, 3
      %p74 = por %p72, %p73
      %p75 = scmp.ne.s32.totalorder %s64, %s65
      %p76 = scmp.eq.s32.totalorder %s16, 0
      %p77 = por %p75, %p76
      %p78 = scmp.ne.s32.totalorder %s64, %s65
      %p79 = scmp.eq.s32.totalorder %s17, 3
      %p80 = por %p78, %p79
      %p82 = scmp.ne.s32.totalorder %s65, %s81
      %p83 = scmp.eq.s32.totalorder %s17, 0
      %p84 = por %p82, %p83
      %s86 = sadd.s32 %s85, 1
      %p89 = scmp.eq.s32.totalorder %s11, 3
      %p90 = scmp.ne.s32.totalorder %s85, %s87
      %p91 = scmp.eq.s32.totalorder %s11, 0
      %p92 = por %p90, %p91
      %p93 = scmp.ne.s32.totalorder %s85, %s87
      %p94 = scmp.eq.s32.totalorder %s16, 3
      %p95 = por %p93, %p94
      %p96 = scmp.ne.s32.totalorder %s87, %s88
      %p97 = scmp.eq.s32.totalorder %s16, 0
      %p98 = por %p96, %p97
      %p99 = scmp.ne.s32.totalorder %s87, %s88
      %p100 = scmp.eq.s32.totalorder %s17, 3
      %p101 = por %p99, %p100
      %p103 = scmp.ne.s32.totalorder %s88, %s102
      %p104 = scmp.eq.s32.totalorder %s17, 0
      %p105 = por %p103, %p104
      %s107 = sadd.s32 %s106, 1
      %p110 = scmp.eq.s32.totalorder %s11, 3
      %p111 = scmp.ne.s32.totalorder %s106, %s108
      %p112 = scmp.eq.s32.totalorder %s11, 0
      %p113 = por %p111, %p112
      %p114 = scmp.ne.s32.totalorder %s106, %s108
      %p115 = scmp.eq.s32.totalorder %s16, 3
      %p116 = por %p114, %p115
      %p117 = scmp.ne.s32.totalorder %s108, %s109
      %p118 = scmp.eq.s32.totalorder %s16, 0
      %p119 = por %p117, %p118
      %p120 = scmp.ne.s32.totalorder %s108, %s109
      %p121 = scmp.eq.s32.totalorder %s17, 3
      %p122 = por %p120, %p121
      %p124 = scmp.ne.s32.totalorder %s109, %s123
      %p125 = scmp.eq.s32.totalorder %s17, 0
      %p126 = por %p124, %p125
      %s127 = ssub.s32 %s18, %s30
      %p128 = scmp.eq.s32.totalorder %s127, 0
      %s130 = sadd.s32 %s129, 1
      %s131 = scalar_select %p128, %s129, %s130
      %p134 = pneg %p128
      %p135 = scmp.eq.s32.totalorder %s11, 3
      %p136 = por %p134, %p135
      %p137 = scmp.ne.s32.totalorder %s129, %s132
      %p138 = scmp.eq.s32.totalorder %s11, 0
      %p139 = por %p137, %p138
      %p140 = scmp.ne.s32.totalorder %s129, %s132
      %p141 = scmp.eq.s32.totalorder %s16, 3
      %p142 = por %p140, %p141
      %p143 = scmp.ne.s32.totalorder %s132, %s133
      %p144 = scmp.eq.s32.totalorder %s16, 0
      %p145 = por %p143, %p144
      %p146 = scmp.ne.s32.totalorder %s132, %s133
      %p147 = scmp.eq.s32.totalorder %s17, 3
      %p148 = por %p146, %p147
      %p150 = scmp.ne.s32.totalorder %s133, %s149
      %p151 = scmp.eq.s32.totalorder %s17, 0
      %p152 = por %p150, %p151
      %s153 = ssub.s32 %s18, %s30
      %p154 = scmp.eq.s32.totalorder %s153, 0
      %s156 = sadd.s32 %s155, 1
      %s157 = scalar_select %p154, %s155, %s156
      %p160 = pneg %p154
      %p161 = scmp.eq.s32.totalorder %s11, 3
      %p162 = por %p160, %p161
      %p163 = scmp.ne.s32.totalorder %s155, %s158
      %p164 = scmp.eq.s32.totalorder %s11, 0
      %p165 = por %p163, %p164
      %p166 = scmp.ne.s32.totalorder %s155, %s158
      %p167 = scmp.eq.s32.totalorder %s16, 3
      %p168 = por %p166, %p167
      %p169 = scmp.ne.s32.totalorder %s158, %s159
      %p170 = scmp.eq.s32.totalorder %s16, 0
      %p171 = por %p169, %p170
      %p172 = scmp.ne.s32.totalorder %s158, %s159
      %p173 = scmp.eq.s32.totalorder %s17, 3
      %p174 = por %p172, %p173
      %p176 = scmp.ne.s32.totalorder %s159, %s175
      %p177 = scmp.eq.s32.totalorder %s17, 0
      %p178 = por %p176, %p177
      %p179 = scmp.le.s32.totalorder 1, %s11
      %p180 = scmp.lt.s32.totalorder %s11, 5
      %p181 = pnand %p179, %p180
      %p182 = pneg %p181
      // Predicated region
      $region9: #{molecule_gnn_forward.1} parent=5 // pred_check
        _
      $region10: #{molecule_gnn_forward.1} parent=5 // pred_check_branch
        %184 = sbr.rel (%p181) target = $region12
      $region11: #{molecule_gnn_forward.1} parent=5 // pred_region
        %s185 = ssub.s32 %s11, 1
        // Predicated region
        $region13: #{molecule_gnn_forward.1} parent=11 // pred_check
          %p186 = pneg %p98
        $region14: #{molecule_gnn_forward.1} parent=11 // pred_check_branch
          %188 = sbr.rel (%p186) target = $region16
        $region15: #{molecule_gnn_forward.1} parent=11 // pred_region
          _
        $region16: #{molecule_gnn_forward.1} parent=11 // pred_fallthru
          _
        // Predicated region
        $region17: #{molecule_gnn_forward.1} parent=11 // pred_check
          %p189 = pneg %p119
        $region18: #{molecule_gnn_forward.1} parent=11 // pred_check_branch
          %191 = sbr.rel (%p189) target = $region20
        $region19: #{molecule_gnn_forward.1} parent=11 // pred_region
          _
        $region20: #{molecule_gnn_forward.1} parent=11 // pred_fallthru
          _
      $region12: #{molecule_gnn_forward.1} parent=5 // pred_fallthru
        _
      %p192 = scmp.lt.s32.totalorder %s11, 4
      // Predicated region
      $region21: #{molecule_gnn_forward.1} parent=5 // pred_check
        %p193 = pneg %p192
      $region22: #{molecule_gnn_forward.1} parent=5 // pred_check_branch
        %195 = sbr.rel (%p193) target = $region24
      $region23: #{molecule_gnn_forward.1} parent=5 // pred_region
        // Predicated region
        $region25: #{molecule_gnn_forward.1} parent=23 // pred_check
          %p196 = pneg %p45
        $region26: #{molecule_gnn_forward.1} parent=23 // pred_check_branch
          %198 = sbr.rel (%p196) target = $region28
        $region27: #{molecule_gnn_forward.1} parent=23 // pred_region
          %s199 = sand.u32 %s35, 1
          %s200 = sand.u32 %s35, 1
          %s201 = smul.addr %s200, 64
          %s202 = scalar_lea.vmem [#allocation3], %s201
          %s203 = smul.u32 16, %s18
          %s204 = smul.addr %s203, 2
          %s205 = sadd.s32 %s19, %s204
          %s206 = smul.addr %s205, 4
          %s207 = scalar_lea.vmem %s0, %s206
          // Predicated region
          $region29: #{molecule_gnn_forward.1} parent=27 // pred_check
            _
          $region30: #{molecule_gnn_forward.1} parent=27 // pred_check_branch
            %209 = sbr.rel (0) target = $region32
          $region31: #{molecule_gnn_forward.1} parent=27 // pred_region
            // Predicated region
            $region33: #{molecule_gnn_forward.1} parent=31 // pred_check
              _
            $region34: #{molecule_gnn_forward.1} parent=31 // pred_check_branch
              %211 = sbr.rel target = $region36
            $region35: #{molecule_gnn_forward.1} parent=31 // pred_region
              // Predicated region
              $region48: #{molecule_gnn_forward.1} parent=35 // pred_check
                _
              $region49: #{molecule_gnn_forward.1} parent=35 // pred_check_branch
                %257 = sbr.rel (0) target = $region51
              $region50: #{molecule_gnn_forward.1} parent=35 // pred_region
                loop: start=0, step=1, limit=1
                $region52: #{molecule_gnn_forward.1} parent=50 // loop_pre_header
                  _
                $region53: #{molecule_gnn_forward.1} parent=50 // loop_header
                  %s259 = sphi 0, %s263
                  %p260 = scmp.ge.s32.totalorder %s259, 1
                  %s264 = sphi %s207, %s207
                  %s265 = sphi %s202, %s202
                $region54: #{molecule_gnn_forward.1} parent=50 // loop_header_branch
                  %262 = sbr.rel (%p260) target = $region58
                $region55: #{molecule_gnn_forward.1} parent=50 // loop_body
                  _
                $region56: #{molecule_gnn_forward.1} parent=50 // loop_footer
                  %s263 = sadd.s32 1, %s259
                $region57: #{molecule_gnn_forward.1} parent=50 // loop_footer_branch
                  %258 = sbr.rel target = $region53
                $region58: #{molecule_gnn_forward.1} parent=50 // loop_exit
                  _
                %s267 = ssub.s32 16, 1
                loop: start=0, step=1, limit=1
                $region59: #{molecule_gnn_forward.1} parent=50 // loop_pre_header
                  _
                $region60: #{molecule_gnn_forward.1} parent=50 // loop_header
                  %s269 = sphi 0, %s273
                  %p270 = scmp.ge.s32.totalorder %s269, 1
                  %s274 = sphi %s207, %s207
                  %s275 = sphi %s202, %s202
                $region61: #{molecule_gnn_forward.1} parent=50 // loop_header_branch
                  %272 = sbr.rel (%p270) target = $region65
                $region62: #{molecule_gnn_forward.1} parent=50 // loop_body
                  %v276 = vld [vmem:[%s274] sm:%s267]
                  %277 = vst [vmem:[%s275] sm:%s267] %v276
                  %v278 = vld [vmem:[%s274 + $0x8] sm:%s267]
                  %279 = vst [vmem:[%s275 + $0x4] sm:%s267] %v278
                  %v280 = vld [vmem:[%s274 + $0x10] sm:%s267]
                  %281 = vst [vmem:[%s275 + $0x8] sm:%s267] %v280
                  %v282 = vld [vmem:[%s274 + $0x18] sm:%s267]
                  %283 = vst [vmem:[%s275 + $0xc] sm:%s267] %v282
                  %v284 = vld [vmem:[%s274 + $0x20] sm:%s267]
                  %285 = vst [vmem:[%s275 + $0x10] sm:%s267] %v284
                  %v286 = vld [vmem:[%s274 + $0x28] sm:%s267]
                  %287 = vst [vmem:[%s275 + $0x14] sm:%s267] %v286
                  %v288 = vld [vmem:[%s274 + $0x30] sm:%s267]
                  %289 = vst [vmem:[%s275 + $0x18] sm:%s267] %v288
                  %v290 = vld [vmem:[%s274 + $0x38] sm:%s267]
                  %291 = vst [vmem:[%s275 + $0x1c] sm:%s267] %v290
                  %v292 = vld [vmem:[%s274 + $0x40] sm:%s267]
                  %293 = vst [vmem:[%s275 + $0x20] sm:%s267] %v292
                  %v294 = vld [vmem:[%s274 + $0x48] sm:%s267]
                  %295 = vst [vmem:[%s275 + $0x24] sm:%s267] %v294
                  %v296 = vld [vmem:[%s274 + $0x50] sm:%s267]
                  %297 = vst [vmem:[%s275 + $0x28] sm:%s267] %v296
                  %v298 = vld [vmem:[%s274 + $0x58] sm:%s267]
                  %299 = vst [vmem:[%s275 + $0x2c] sm:%s267] %v298
                  %v300 = vld [vmem:[%s274 + $0x60] sm:%s267]
                  %301 = vst [vmem:[%s275 + $0x30] sm:%s267] %v300
                  %v302 = vld [vmem:[%s274 + $0x68] sm:%s267]
                  %303 = vst [vmem:[%s275 + $0x34] sm:%s267] %v302
                  %v304 = vld [vmem:[%s274 + $0x70] sm:%s267]
                  %305 = vst [vmem:[%s275 + $0x38] sm:%s267] %v304
                  %v306 = vld [vmem:[%s274 + $0x78] sm:%s267]
                  %307 = vst [vmem:[%s275 + $0x3c] sm:%s267] %v306
                $region63: #{molecule_gnn_forward.1} parent=50 // loop_footer
                  %s273 = sadd.s32 1, %s269
                $region64: #{molecule_gnn_forward.1} parent=50 // loop_footer_branch
                  %268 = sbr.rel target = $region60
                $region65: #{molecule_gnn_forward.1} parent=50 // loop_exit
                  _
              $region51: #{molecule_gnn_forward.1} parent=35 // pred_fallthru
                _
            $region36: #{molecule_gnn_forward.1} parent=31 // pred_fallthru
              _
            // Predicated region
            $region37: #{molecule_gnn_forward.1} parent=31 // pred_check
              _
            $region38: #{molecule_gnn_forward.1} parent=31 // pred_check_branch
              %213 = sbr.rel (0) target = $region40
            $region39: #{molecule_gnn_forward.1} parent=31 // pred_region
              %s215 = ssub.s32 16, 1
              loop: start=0, step=1, limit=1
              $region41: #{molecule_gnn_forward.1} parent=39 // loop_pre_header
                _
              $region42: #{molecule_gnn_forward.1} parent=39 // loop_header
                %s217 = sphi 0, %s221
                %p218 = scmp.ge.s32.totalorder %s217, 1
                %s222 = sphi %s207, %s207
                %s223 = sphi %s202, %s202
              $region43: #{molecule_gnn_forward.1} parent=39 // loop_header_branch
                %220 = sbr.rel (%p218) target = $region47
              $region44: #{molecule_gnn_forward.1} parent=39 // loop_body
                %v224 = vld [vmem:[%s222] sm:%s215]
                %225 = vst [vmem:[%s223] sm:%s215] %v224
                %v226 = vld [vmem:[%s222 + $0x8] sm:%s215]
                %227 = vst [vmem:[%s223 + $0x4] sm:%s215] %v226
                %v228 = vld [vmem:[%s222 + $0x10] sm:%s215]
                %229 = vst [vmem:[%s223 + $0x8] sm:%s215] %v228
                %v230 = vld [vmem:[%s222 + $0x18] sm:%s215]
                %231 = vst [vmem:[%s223 + $0xc] sm:%s215] %v230
                %v232 = vld [vmem:[%s222 + $0x20] sm:%s215]
                %233 = vst [vmem:[%s223 + $0x10] sm:%s215] %v232
                %v234 = vld [vmem:[%s222 + $0x28] sm:%s215]
                %235 = vst [vmem:[%s223 + $0x14] sm:%s215] %v234
                %v236 = vld [vmem:[%s222 + $0x30] sm:%s215]
                %237 = vst [vmem:[%s223 + $0x18] sm:%s215] %v236
                %v238 = vld [vmem:[%s222 + $0x38] sm:%s215]
                %239 = vst [vmem:[%s223 + $0x1c] sm:%s215] %v238
                %v240 = vld [vmem:[%s222 + $0x40] sm:%s215]
                %241 = vst [vmem:[%s223 + $0x20] sm:%s215] %v240
                %v242 = vld [vmem:[%s222 + $0x48] sm:%s215]
                %243 = vst [vmem:[%s223 + $0x24] sm:%s215] %v242
                %v244 = vld [vmem:[%s222 + $0x50] sm:%s215]
                %245 = vst [vmem:[%s223 + $0x28] sm:%s215] %v244
                %v246 = vld [vmem:[%s222 + $0x58] sm:%s215]
                %247 = vst [vmem:[%s223 + $0x2c] sm:%s215] %v246
                %v248 = vld [vmem:[%s222 + $0x60] sm:%s215]
                %249 = vst [vmem:[%s223 + $0x30] sm:%s215] %v248
                %v250 = vld [vmem:[%s222 + $0x68] sm:%s215]
                %251 = vst [vmem:[%s223 + $0x34] sm:%s215] %v250
                %v252 = vld [vmem:[%s222 + $0x70] sm:%s215]
                %253 = vst [vmem:[%s223 + $0x38] sm:%s215] %v252
                %v254 = vld [vmem:[%s222 + $0x78] sm:%s215]
                %255 = vst [vmem:[%s223 + $0x3c] sm:%s215] %v254
              $region45: #{molecule_gnn_forward.1} parent=39 // loop_footer
                %s221 = sadd.s32 1, %s217
              $region46: #{molecule_gnn_forward.1} parent=39 // loop_footer_branch
                %216 = sbr.rel target = $region42
              $region47: #{molecule_gnn_forward.1} parent=39 // loop_exit
                _
            $region40: #{molecule_gnn_forward.1} parent=31 // pred_fallthru
              _
          $region32: #{molecule_gnn_forward.1} parent=27 // pred_fallthru
            _
          %308 = vnop
        $region28: #{molecule_gnn_forward.1} parent=23 // pred_fallthru
          _
        // Predicated region
        $region66: #{molecule_gnn_forward.1} parent=23 // pred_check
          %p309 = pneg %p71
        $region67: #{molecule_gnn_forward.1} parent=23 // pred_check_branch
          %311 = sbr.rel (%p309) target = $region69
        $region68: #{molecule_gnn_forward.1} parent=23 // pred_region
          %s312 = smul.u32 16, %s19
          %p313 = scmp.lt.s32.totalorder %s312, 31
          %s314 = scalar_select %p313, %s312, 31
          %s315 = smul.addr %s314, 4
          %s316 = scalar_lea.vmem %s1, %s315
          %s317 = smul.u32 16, %s19
        $region69: #{molecule_gnn_forward.1} parent=23 // pred_fallthru
          _
        // Predicated region
        $region70: #{molecule_gnn_forward.1} parent=23 // pred_check
          %p318 = pneg %p139
        $region71: #{molecule_gnn_forward.1} parent=23 // pred_check_branch
          %320 = sbr.rel (%p318) target = $region73
        $region72: #{molecule_gnn_forward.1} parent=23 // pred_region
          %p321 = scmp.lt.s32.totalorder %s18, 1
          %s322 = scalar_select %p321, %s18, 1
          %s323 = smul.addr %s322, 4
          %s324 = scalar_lea.vmem %s4, %s323
        $region73: #{molecule_gnn_forward.1} parent=23 // pred_fallthru
          _
      $region24: #{molecule_gnn_forward.1} parent=5 // pred_fallthru
        _
      %p325 = scmp.le.s32.totalorder 1, %s11
      %p326 = scmp.lt.s32.totalorder %s11, 5
      %p327 = pnand %p325, %p326
      %p328 = pneg %p327
      // Predicated region
      $region74: #{molecule_gnn_forward.1} parent=5 // pred_check
        _
      $region75: #{molecule_gnn_forward.1} parent=5 // pred_check_branch
        %330 = sbr.rel (%p327) target = $region77
      $region76: #{molecule_gnn_forward.1} parent=5 // pred_region
        %s331 = ssub.s32 %s11, 1
        %s332 = sand.u32 %s38, 1
        %s333 = sand.u32 %s38, 1
        %s334 = smul.addr %s333, 64
        %s335 = scalar_lea.vmem [#allocation3], %s334
        // Predicated region
        $region78: #{molecule_gnn_forward.1} parent=76 // pred_check
          %p336 = pneg %p51
        $region79: #{molecule_gnn_forward.1} parent=76 // pred_check_branch
          %338 = sbr.rel (%p336) target = $region81
        $region80: #{molecule_gnn_forward.1} parent=76 // pred_region
          _
        $region81: #{molecule_gnn_forward.1} parent=76 // pred_fallthru
          _
        %s339 = sand.u32 %s38, 1
        %s340 = sand.u32 %s38, 1
        %s341 = smul.addr %s340, 64
        %s342 = scalar_lea.vmem [#allocation3], %s341
        %p343 = pneg %p51
        %p344 = pneg %p48
        %s345 = smul.u32 16, %s21
        %p346 = scmp.lt.s32.totalorder %s345, 31
        %s347 = scalar_select %p346, %s345, 31
        %s348 = smul.addr %s347, 4
        %s349 = scalar_lea.vmem %s1, %s348
        %p350 = pneg %p77
        %p351 = pneg %p74
        %p352 = pneg %p98
        %p353 = pneg %p95
        %p354 = pneg %p119
        %p355 = pneg %p116
        %p356 = scmp.lt.s32.totalorder %s20, 1
        %s357 = scalar_select %p356, %s20, 1
        %s358 = smul.addr %s357, 4
        %s359 = scalar_lea.vmem %s4, %s358
        %p360 = pneg %p145
        %p361 = pneg %p142
        %p362 = pneg %p171
        %p363 = pneg %p168
        %p364 = scmp.lt.s32.totalorder %s20, 1
        %s365 = scalar_select %p364, %s20, 1
        %s366 = smul.addr %s365, 8
        %s367 = scalar_lea.vmem %s5, %s366
        %s368 = smul.u32 16, %s20
        %s369 = smul.u32 16, %s21
        %p370 = scmp.lt.s32.totalorder %s369, 31
        %s371 = scalar_select %p370, %s369, 31
        %s372 = smul.addr %s371, 4
        %s373 = scalar_lea.vmem %s1, %s372
        %s374 = smul.u32 16, %s21
        %p375 = scmp.lt.s32.totalorder %s20, 1
        %s376 = scalar_select %p375, %s20, 1
        %s377 = smul.addr %s376, 4
        %s378 = scalar_lea.vmem %s4, %s377
        %p379 = scmp.lt.s32.totalorder %s20, 1
        %s380 = scalar_select %p379, %s20, 1
        %s381 = smul.addr %s380, 8
        %s382 = scalar_lea.vmem %s5, %s381
        %p384 = scmp.eq.s32.totalorder %s21, 0
        // Predicated region
        $region82: #{molecule_gnn_forward.1} parent=76 // pred_check
          %p385 = pneg %p384
        $region83: #{molecule_gnn_forward.1} parent=76 // pred_check_branch
          %387 = sbr.rel (%p385) target = $region85
        $region84: #{molecule_gnn_forward.1} parent=76 // pred_region
          %388 = vst [vmem:[#allocation2] sm:$0xff] 0.0
          %389 = vst [vmem:[#allocation2 + $0x8] sm:$0xff] 0.0
          %390 = vst [vmem:[#allocation2 + $0x10] sm:$0xff] 0.0
          %391 = vst [vmem:[#allocation2 + $0x18] sm:$0xff] 0.0
          %392 = vst [vmem:[#allocation2 + $0x20] sm:$0xff] 0.0
          %393 = vst [vmem:[#allocation2 + $0x28] sm:$0xff] 0.0
          %394 = vst [vmem:[#allocation2 + $0x30] sm:$0xff] 0.0
          %395 = vst [vmem:[#allocation2 + $0x38] sm:$0xff] 0.0
          %396 = vst [vmem:[#allocation2 + $0x40] sm:$0xff] 0.0
          %397 = vst [vmem:[#allocation2 + $0x48] sm:$0xff] 0.0
          %398 = vst [vmem:[#allocation2 + $0x50] sm:$0xff] 0.0
          %399 = vst [vmem:[#allocation2 + $0x58] sm:$0xff] 0.0
          %400 = vst [vmem:[#allocation2 + $0x60] sm:$0xff] 0.0
          %401 = vst [vmem:[#allocation2 + $0x68] sm:$0xff] 0.0
          %402 = vst [vmem:[#allocation2 + $0x70] sm:$0xff] 0.0
          %403 = vst [vmem:[#allocation2 + $0x78] sm:$0xff] 0.0
        $region85: #{molecule_gnn_forward.1} parent=76 // pred_fallthru
          _
        %v404 = vld [vmem:[%s373] sm:$0xf]
        %v405 = vld [vmem:[%s373 + $0x4] sm:$0xf]
        %v406 = vld [vmem:[%s373 + $0x8] sm:$0xf]
        %v407 = vld [vmem:[%s373 + $0xc] sm:$0xf]
        %v408 = vld [vmem:[%s373 + $0x10] sm:$0xf]
        %v409 = vld [vmem:[%s373 + $0x14] sm:$0xf]
        %v410 = vld [vmem:[%s373 + $0x18] sm:$0xf]
        %v411 = vld [vmem:[%s373 + $0x1c] sm:$0xf]
        %v412 = vld [vmem:[%s373 + $0x20] sm:$0xf]
        %v413 = vld [vmem:[%s373 + $0x24] sm:$0xf]
        %v414 = vld [vmem:[%s373 + $0x28] sm:$0xf]
        %v415 = vld [vmem:[%s373 + $0x2c] sm:$0xf]
        %v416 = vld [vmem:[%s373 + $0x30] sm:$0xf]
        %v417 = vld [vmem:[%s373 + $0x34] sm:$0xf]
        %v418 = vld [vmem:[%s373 + $0x38] sm:$0xf]
        %v419 = vld [vmem:[%s373 + $0x3c] sm:$0xf]
        %v420 = vld [vmem:[%s2] sm:$0xf]
        %v421 = vld [vmem:[%s2 + $0x4] sm:$0xf]
        %v438 = vunpack.c.l.b16 %v404
        %v439 = vunpack.c.l.b16 %v405
        %v440 = vunpack.c.l.b16 %v406
        %v441 = vunpack.c.l.b16 %v407
        %v442 = vunpack.c.l.b16 %v408
        %v443 = vunpack.c.l.b16 %v409
        %v444 = vunpack.c.l.b16 %v410
        %v445 = vunpack.c.l.b16 %v411
        %v446 = vunpack.c.l.b16 %v412
        %v447 = vunpack.c.l.b16 %v413
        %v448 = vunpack.c.l.b16 %v414
        %v449 = vunpack.c.l.b16 %v415
        %v450 = vunpack.c.l.b16 %v416
        %v451 = vunpack.c.l.b16 %v417
        %v452 = vunpack.c.l.b16 %v418
        %v453 = vunpack.c.l.b16 %v419
        %v454 = vpack.c.b16 %v439, %v438
        %v455 = vpack.c.b16 %v441, %v440
        %v456 = vpack.c.b16 %v443, %v442
        %v457 = vpack.c.b16 %v445, %v444
        %v458 = vpack.c.b16 %v447, %v446
        %v459 = vpack.c.b16 %v449, %v448
        %v460 = vpack.c.b16 %v451, %v450
        %v461 = vpack.c.b16 %v453, %v452
        %v464 = vunpack.c.l.b16 %v420
        %v465 = vunpack.c.l.b16 %v421
        %v466 = vpack.c.b16 %v465, %v464
        %vm468 = vcmask 130048
        %v470 = vsel %vm468, %v454, 0
        %v473 = vsel %vm468, %v455, 0
        %v476 = vsel %vm468, %v456, 0
        %v479 = vsel %vm468, %v457, 0
        %v482 = vsel %vm468, %v458, 0
        %v485 = vsel %vm468, %v459, 0
        %v488 = vsel %vm468, %v460, 0
        %v491 = vsel %vm468, %v461, 0
        %493 = vmatpush.bf16.msra.mxu0 0
        %494 = vmatpush.bf16.msra.mxu0 0
        %495 = vmatpush.bf16.msra.mxu0 0
        %496 = vmatpush.bf16.msra.mxu0 0
        %497 = vmatpush.bf16.msra.mxu0 0
        %498 = vmatpush.bf16.msra.mxu0 0
        %499 = vmatpush.bf16.msra.mxu0 0
        %500 = vmatpush.bf16.msra.mxu0 %v466
        %501 = vmatmul.bf16.gmra.mxu0 %v470
        %v502 = vpop.f32.mrf.mxu0
        %v503 = vadd.f32 0.0, %v502
        %v504 = vpop.f32.mrf.mxu0
        %v505 = vadd.f32 0.0, %v504
        %506 = vmatmul.bf16.gmra.mxu0 %v473
        %v507 = vpop.f32.mrf.mxu0
        %v508 = vadd.f32 0.0, %v507
        %v509 = vpop.f32.mrf.mxu0
        %v510 = vadd.f32 0.0, %v509
        %511 = vmatmul.bf16.gmra.mxu0 %v476
        %v512 = vpop.f32.mrf.mxu0
        %v513 = vadd.f32 0.0, %v512
        %v514 = vpop.f32.mrf.mxu0
        %v515 = vadd.f32 0.0, %v514
        %516 = vmatmul.bf16.gmra.mxu0 %v479
        %v517 = vpop.f32.mrf.mxu0
        %v518 = vadd.f32 0.0, %v517
        %v519 = vpop.f32.mrf.mxu0
        %v520 = vadd.f32 0.0, %v519
        %521 = vmatmul.bf16.gmra.mxu0 %v482
        %v522 = vpop.f32.mrf.mxu0
        %v523 = vadd.f32 0.0, %v522
        %v524 = vpop.f32.mrf.mxu0
        %v525 = vadd.f32 0.0, %v524
        %526 = vmatmul.bf16.gmra.mxu0 %v485
        %v527 = vpop.f32.mrf.mxu0
        %v528 = vadd.f32 0.0, %v527
        %v529 = vpop.f32.mrf.mxu0
        %v530 = vadd.f32 0.0, %v529
        %531 = vmatmul.bf16.gmra.mxu0 %v488
        %v532 = vpop.f32.mrf.mxu0
        %v533 = vadd.f32 0.0, %v532
        %v534 = vpop.f32.mrf.mxu0
        %v535 = vadd.f32 0.0, %v534
        %536 = vmatmul.bf16.gmra.mxu0 %v491
        %v537 = vpop.f32.mrf.mxu0
        %v538 = vadd.f32 0.0, %v537
        %v539 = vpop.f32.mrf.mxu0
        %v540 = vadd.f32 0.0, %v539
        %541 = vdwg.mxu0
        %v542 = vld [vmem:[#allocation2] sm:$0xff]
        %v543 = vld [vmem:[#allocation2 + $0x8] sm:$0xff]
        %v544 = vld [vmem:[#allocation2 + $0x10] sm:$0xff]
        %v545 = vld [vmem:[#allocation2 + $0x18] sm:$0xff]
        %v546 = vld [vmem:[#allocation2 + $0x20] sm:$0xff]
        %v547 = vld [vmem:[#allocation2 + $0x28] sm:$0xff]
        %v548 = vld [vmem:[#allocation2 + $0x30] sm:$0xff]
        %v549 = vld [vmem:[#allocation2 + $0x38] sm:$0xff]
        %v550 = vld [vmem:[#allocation2 + $0x40] sm:$0xff]
        %v551 = vld [vmem:[#allocation2 + $0x48] sm:$0xff]
        %v552 = vld [vmem:[#allocation2 + $0x50] sm:$0xff]
        %v553 = vld [vmem:[#allocation2 + $0x58] sm:$0xff]
        %v554 = vld [vmem:[#allocation2 + $0x60] sm:$0xff]
        %v555 = vld [vmem:[#allocation2 + $0x68] sm:$0xff]
        %v556 = vld [vmem:[#allocation2 + $0x70] sm:$0xff]
        %v557 = vld [vmem:[#allocation2 + $0x78] sm:$0xff]
        %v558 = vld [vmem:[%s335] sm:$0xf]
        %v559 = vld [vmem:[%s335 + $0x4] sm:$0xf]
        %v560 = vld [vmem:[%s335 + $0x8] sm:$0xf]
        %v561 = vld [vmem:[%s335 + $0xc] sm:$0xf]
        %v562 = vld [vmem:[%s335 + $0x10] sm:$0xf]
        %v563 = vld [vmem:[%s335 + $0x14] sm:$0xf]
        %v564 = vld [vmem:[%s335 + $0x18] sm:$0xf]
        %v565 = vld [vmem:[%s335 + $0x1c] sm:$0xf]
        %v566 = vld [vmem:[%s335 + $0x20] sm:$0xf]
        %v567 = vld [vmem:[%s335 + $0x24] sm:$0xf]
        %v568 = vld [vmem:[%s335 + $0x28] sm:$0xf]
        %v569 = vld [vmem:[%s335 + $0x2c] sm:$0xf]
        %v570 = vld [vmem:[%s335 + $0x30] sm:$0xf]
        %v571 = vld [vmem:[%s335 + $0x34] sm:$0xf]
        %v572 = vld [vmem:[%s335 + $0x38] sm:$0xf]
        %v573 = vld [vmem:[%s335 + $0x3c] sm:$0xf]
        %v574 = vpack.c.bf16 %v505, %v503
        %v575 = vpack.c.bf16 %v510, %v508
        %v576 = vpack.c.bf16 %v515, %v513
        %v577 = vpack.c.bf16 %v520, %v518
        %v578 = vpack.c.bf16 %v525, %v523
        %v579 = vpack.c.bf16 %v530, %v528
        %v580 = vpack.c.bf16 %v535, %v533
        %v581 = vpack.c.bf16 %v540, %v538
        %v598 = vunpack.c.l.b16 %v558
        %v599 = vunpack.c.l.b16 %v559
        %v600 = vunpack.c.l.b16 %v560
        %v601 = vunpack.c.l.b16 %v561
        %v602 = vunpack.c.l.b16 %v562
        %v603 = vunpack.c.l.b16 %v563
        %v604 = vunpack.c.l.b16 %v564
        %v605 = vunpack.c.l.b16 %v565
        %v606 = vunpack.c.l.b16 %v566
        %v607 = vunpack.c.l.b16 %v567
        %v608 = vunpack.c.l.b16 %v568
        %v609 = vunpack.c.l.b16 %v569
        %v610 = vunpack.c.l.b16 %v570
        %v611 = vunpack.c.l.b16 %v571
        %v612 = vunpack.c.l.b16 %v572
        %v613 = vunpack.c.l.b16 %v573
        %v614 = vpack.c.b16 %v599, %v598
        %v615 = vpack.c.b16 %v601, %v600
        %v616 = vpack.c.b16 %v603, %v602
        %v617 = vpack.c.b16 %v605, %v604
        %v618 = vpack.c.b16 %v607, %v606
        %v619 = vpack.c.b16 %v609, %v608
        %v620 = vpack.c.b16 %v611, %v610
        %v621 = vpack.c.b16 %v613, %v612
        %630 = vmatpush.bf16.msra.mxu0 %v581
        %631 = vmatpush.bf16.msra.mxu0 %v580
        %632 = vmatpush.bf16.msra.mxu0 %v579
        %633 = vmatpush.bf16.msra.mxu0 %v578
        %634 = vmatpush.bf16.msra.mxu0 %v577
        %635 = vmatpush.bf16.msra.mxu0 %v576
        %636 = vmatpush.bf16.msra.mxu0 %v575
        %637 = vmatpush.bf16.msra.mxu0 %v574
        %638 = vmatmul.bf16.gmra.mxu0 %v614
        %v639 = vpop.f32.mrf.mxu0
        %v640 = vadd.f32 0.0, %v639
        %v641 = vpop.f32.mrf.mxu0
        %v642 = vadd.f32 0.0, %v641
        %643 = vmatmul.bf16.gmra.mxu0 %v615
        %v644 = vpop.f32.mrf.mxu0
        %v645 = vadd.f32 0.0, %v644
        %v646 = vpop.f32.mrf.mxu0
        %v647 = vadd.f32 0.0, %v646
        %648 = vmatmul.bf16.gmra.mxu0 %v616
        %v649 = vpop.f32.mrf.mxu0
        %v650 = vadd.f32 0.0, %v649
        %v651 = vpop.f32.mrf.mxu0
        %v652 = vadd.f32 0.0, %v651
        %653 = vmatmul.bf16.gmra.mxu0 %v617
        %v654 = vpop.f32.mrf.mxu0
        %v655 = vadd.f32 0.0, %v654
        %v656 = vpop.f32.mrf.mxu0
        %v657 = vadd.f32 0.0, %v656
        %658 = vmatmul.bf16.gmra.mxu0 %v618
        %v659 = vpop.f32.mrf.mxu0
        %v660 = vadd.f32 0.0, %v659
        %v661 = vpop.f32.mrf.mxu0
        %v662 = vadd.f32 0.0, %v661
        %663 = vmatmul.bf16.gmra.mxu0 %v619
        %v664 = vpop.f32.mrf.mxu0
        %v665 = vadd.f32 0.0, %v664
        %v666 = vpop.f32.mrf.mxu0
        %v667 = vadd.f32 0.0, %v666
        %668 = vmatmul.bf16.gmra.mxu0 %v620
        %v669 = vpop.f32.mrf.mxu0
        %v670 = vadd.f32 0.0, %v669
        %v671 = vpop.f32.mrf.mxu0
        %v672 = vadd.f32 0.0, %v671
        %673 = vmatmul.bf16.gmra.mxu0 %v621
        %v674 = vpop.f32.mrf.mxu0
        %v675 = vadd.f32 0.0, %v674
        %v676 = vpop.f32.mrf.mxu0
        %v677 = vadd.f32 0.0, %v676
        %678 = vdwg.mxu0
        %v679 = vadd.f32 %v542, %v640
        %v680 = vadd.f32 %v543, %v642
        %v681 = vadd.f32 %v544, %v645
        %v682 = vadd.f32 %v545, %v647
        %v683 = vadd.f32 %v546, %v650
        %v684 = vadd.f32 %v547, %v652
        %v685 = vadd.f32 %v548, %v655
        %v686 = vadd.f32 %v549, %v657
        %v687 = vadd.f32 %v550, %v660
        %v688 = vadd.f32 %v551, %v662
        %v689 = vadd.f32 %v552, %v665
        %v690 = vadd.f32 %v553, %v667
        %v691 = vadd.f32 %v554, %v670
        %v692 = vadd.f32 %v555, %v672
        %v693 = vadd.f32 %v556, %v675
        %v694 = vadd.f32 %v557, %v677
        %695 = vst [vmem:[#allocation2] sm:$0xff] %v679
        %696 = vst [vmem:[#allocation2 + $0x8] sm:$0xff] %v680
        %697 = vst [vmem:[#allocation2 + $0x10] sm:$0xff] %v681
        %698 = vst [vmem:[#allocation2 + $0x18] sm:$0xff] %v682
        %699 = vst [vmem:[#allocation2 + $0x20] sm:$0xff] %v683
        %700 = vst [vmem:[#allocation2 + $0x28] sm:$0xff] %v684
        %701 = vst [vmem:[#allocation2 + $0x30] sm:$0xff] %v685
        %702 = vst [vmem:[#allocation2 + $0x38] sm:$0xff] %v686
        %703 = vst [vmem:[#allocation2 + $0x40] sm:$0xff] %v687
        %704 = vst [vmem:[#allocation2 + $0x48] sm:$0xff] %v688
        %705 = vst [vmem:[#allocation2 + $0x50] sm:$0xff] %v689
        %706 = vst [vmem:[#allocation2 + $0x58] sm:$0xff] %v690
        %707 = vst [vmem:[#allocation2 + $0x60] sm:$0xff] %v691
        %708 = vst [vmem:[#allocation2 + $0x68] sm:$0xff] %v692
        %709 = vst [vmem:[#allocation2 + $0x70] sm:$0xff] %v693
        %710 = vst [vmem:[#allocation2 + $0x78] sm:$0xff] %v694
        %p711 = scmp.eq.s32.totalorder %s21, 1
        // Predicated region
        $region86: #{molecule_gnn_forward.1} parent=76 // pred_check
          %p712 = pneg %p711
        $region87: #{molecule_gnn_forward.1} parent=76 // pred_check_branch
          %714 = sbr.rel (%p712) target = $region89
        $region88: #{molecule_gnn_forward.1} parent=76 // pred_region
          %v715 = vld [vmem:[#allocation2] sm:$0xff]
          %v716 = vld [vmem:[#allocation2 + $0x8] sm:$0xff]
          %v717 = vld [vmem:[#allocation2 + $0x10] sm:$0xff]
          %v718 = vld [vmem:[#allocation2 + $0x18] sm:$0xff]
          %v719 = vld [vmem:[#allocation2 + $0x20] sm:$0xff]
          %v720 = vld [vmem:[#allocation2 + $0x28] sm:$0xff]
          %v721 = vld [vmem:[#allocation2 + $0x30] sm:$0xff]
          %v722 = vld [vmem:[#allocation2 + $0x38] sm:$0xff]
          %v723 = vld [vmem:[#allocation2 + $0x40] sm:$0xff]
          %v724 = vld [vmem:[#allocation2 + $0x48] sm:$0xff]
          %v725 = vld [vmem:[#allocation2 + $0x50] sm:$0xff]
          %v726 = vld [vmem:[#allocation2 + $0x58] sm:$0xff]
          %v727 = vld [vmem:[#allocation2 + $0x60] sm:$0xff]
          %v728 = vld [vmem:[#allocation2 + $0x68] sm:$0xff]
          %v729 = vld [vmem:[#allocation2 + $0x70] sm:$0xff]
          %v730 = vld [vmem:[#allocation2 + $0x78] sm:$0xff]
          %v731 = vld [vmem:[%s3] sm:$0x1]
          %v733 = vperm.slane %v731, 0
          %v735 = vadd.f32 %v715, %v733
          %v736 = vadd.f32 %v716, %v733
          %v737 = vadd.f32 %v717, %v733
          %v738 = vadd.f32 %v718, %v733
          %v739 = vadd.f32 %v719, %v733
          %v740 = vadd.f32 %v720, %v733
          %v741 = vadd.f32 %v721, %v733
          %v742 = vadd.f32 %v722, %v733
          %v743 = vadd.f32 %v723, %v733
          %v744 = vadd.f32 %v724, %v733
          %v745 = vadd.f32 %v725, %v733
          %v746 = vadd.f32 %v726, %v733
          %v747 = vadd.f32 %v727, %v733
          %v748 = vadd.f32 %v728, %v733
          %v749 = vadd.f32 %v729, %v733
          %v750 = vadd.f32 %v730, %v733
          %v751 = vmax.f32 %v735, 0.0
          %v752 = vmax.f32 %v736, 0.0
          %v753 = vmax.f32 %v737, 0.0
          %v754 = vmax.f32 %v738, 0.0
          %v755 = vmax.f32 %v739, 0.0
          %v756 = vmax.f32 %v740, 0.0
          %v757 = vmax.f32 %v741, 0.0
          %v758 = vmax.f32 %v742, 0.0
          %v759 = vmax.f32 %v743, 0.0
          %v760 = vmax.f32 %v744, 0.0
          %v761 = vmax.f32 %v745, 0.0
          %v762 = vmax.f32 %v746, 0.0
          %v763 = vmax.f32 %v747, 0.0
          %v764 = vmax.f32 %v748, 0.0
          %v765 = vmax.f32 %v749, 0.0
          %v766 = vmax.f32 %v750, 0.0
          %v767 = vld [vmem:[%s378] sm:$0xf]
          %v768 = vpack.c.bf16 %v752, %v751
          %v769 = vpack.c.bf16 %v754, %v753
          %v770 = vpack.c.bf16 %v756, %v755
          %v771 = vpack.c.bf16 %v758, %v757
          %v772 = vpack.c.bf16 %v760, %v759
          %v773 = vpack.c.bf16 %v762, %v761
          %v774 = vpack.c.bf16 %v764, %v763
          %v775 = vpack.c.bf16 %v766, %v765
          %776 = vmatpush.bf16.msra.mxu0 %v775
          %777 = vmatpush.bf16.msra.mxu0 %v774
          %778 = vmatpush.bf16.msra.mxu0 %v773
          %779 = vmatpush.bf16.msra.mxu0 %v772
          %780 = vmatpush.bf16.msra.mxu0 %v771
          %781 = vmatpush.bf16.msra.mxu0 %v770
          %782 = vmatpush.bf16.msra.mxu0 %v769
          %783 = vmatpush.bf16.msra.mxu0 %v768
          %784 = vmatmul.bf16.gmra.mxu0 %v767
          %v785 = vpop.f32.mrf.mxu0
          %v786 = vadd.f32 0.0, %v785
          %v787 = vpop.f32.mrf.mxu0
          %788 = vdwg.mxu0
          %789 = vst [vmem:[%s382] sm:$0xff] %v786
        $region89: #{molecule_gnn_forward.1} parent=76 // pred_fallthru
          _
        %p790 = scmp.lt.s32.totalorder %s20, 1
        %s791 = scalar_select %p790, %s20, 1
        %s792 = smul.addr %s791, 8
        %s793 = scalar_lea.vmem %s5, %s792
        // Predicated region
        $region90: #{molecule_gnn_forward.1} parent=76 // pred_check
          %p794 = pneg %p168
        $region91: #{molecule_gnn_forward.1} parent=76 // pred_check_branch
          %796 = sbr.rel (%p794) target = $region93
        $region92: #{molecule_gnn_forward.1} parent=76 // pred_region
          _
        $region93: #{molecule_gnn_forward.1} parent=76 // pred_fallthru
          _
      $region77: #{molecule_gnn_forward.1} parent=5 // pred_fallthru
        _
      %p797 = scmp.le.s32.totalorder 2, %s11
      // Predicated region
      $region94: #{molecule_gnn_forward.1} parent=5 // pred_check
        %p798 = pneg %p797
      $region95: #{molecule_gnn_forward.1} parent=5 // pred_check_branch
        %800 = sbr.rel (%p798) target = $region97
      $region96: #{molecule_gnn_forward.1} parent=5 // pred_region
        %s801 = ssub.s32 %s11, 2
        // Predicated region
        $region98: #{molecule_gnn_forward.1} parent=96 // pred_check
          %p802 = pneg %p174
        $region99: #{molecule_gnn_forward.1} parent=96 // pred_check_branch
          %804 = sbr.rel (%p802) target = $region101
        $region100: #{molecule_gnn_forward.1} parent=96 // pred_region
          %p805 = scmp.lt.s32.totalorder %s22, 1
          %s806 = scalar_select %p805, %s22, 1
          %s807 = smul.addr %s806, 8
          %s808 = scalar_lea.vmem %s5, %s807
        $region101: #{molecule_gnn_forward.1} parent=96 // pred_fallthru
          _
      $region97: #{molecule_gnn_forward.1} parent=5 // pred_fallthru
        _
    $region6: #{molecule_gnn_forward.1} parent=1 // loop_footer
      %s15 = sadd.s32 1, %s11
    $region7: #{molecule_gnn_forward.1} parent=1 // loop_footer_branch
      %10 = sbr.rel target = $region3
    $region8: #{molecule_gnn_forward.1} parent=1 // loop_exit
      _

</llo_original>
